<compile_context>
chip_gen: v5e
topology: v5e:2x2
jax: 0.10.0
libtpu: 0.0.40
codegen_flags: <defaults>
</compile_context>

<pallas_src>
import jax
import jax.numpy as jnp
from jax.experimental import pallas as pl
from jax.experimental.pallas import tpu as pltpu


_MAX_TILE_B = 8192          # cap on rows per batch block
_MAX_TILE_C = 2048          # cap on lanes per class chunk (multiple of 128)


def _vmem_limit_bytes():
    cap = 64 * 1024 * 1024            # conservative fallback (v7x physical VMEM)
    try:
        cap = int(getattr(pltpu.get_tpu_info(), "vmem_capacity_bytes", cap))
    except Exception:
        pass
    return min((cap * 3) // 4, 96 * 1024 * 1024)


def _make_kernel(num_classes, epsilon, batch, tile_b, tile_c, num_c_blocks,
                 mask_rows, mask_cols):
    coeff = 1.0 - float(epsilon)
    smooth = float(epsilon) / float(num_classes)

    def kernel(x_ref, t_ref, o_ref, m_sc, l_sc, s_sc, xt_sc):
        i = pl.program_id(0)          # batch block   ("parallel")
        j = pl.program_id(1)          # class chunk   ("arbitrary" reduction)

        @pl.when(j == 0)
        def _():
            m_sc[...] = jnp.full(m_sc.shape, -jnp.inf, jnp.float32)
            l_sc[...] = jnp.zeros(l_sc.shape, jnp.float32)
            s_sc[...] = jnp.zeros(s_sc.shape, jnp.float32)
            xt_sc[...] = jnp.zeros(xt_sc.shape, jnp.float32)

        x = x_ref[...].astype(jnp.float32)              # (TB, TC) f32 compute
        t = t_ref[...]                                  # (TB, 1) int32 labels

        col = j * tile_c + jax.lax.broadcasted_iota(jnp.int32, x.shape, 1)
        if mask_cols:   # last class chunk is clipped: discard garbage columns
            x_for_max = jnp.where(col < num_classes, x, -jnp.inf)
            x_for_sum = jnp.where(col < num_classes, x, 0.0)
        else:
            x_for_max = x
            x_for_sum = x

        # Online-softmax accumulation across class chunks.
        m_old = m_sc[...]
        m_new = jnp.maximum(m_old, jnp.max(x_for_max, axis=1, keepdims=True))
        alpha = jnp.exp(m_old - m_new)
        p_sum = jnp.sum(jnp.exp(x_for_max - m_new), axis=1, keepdims=True)

        m_sc[...] = m_new
        l_sc[...] = alpha * l_sc[...] + p_sum
        s_sc[...] = s_sc[...] + jnp.sum(x_for_sum, axis=1, keepdims=True)
        # x[row, target[row]] lives in exactly one chunk.  Out-of-range labels
        # silently give x_t = 0 (finite loss) instead of raising like PyTorch.
        xt_sc[...] = xt_sc[...] + jnp.sum(
            jnp.where(col == t, x, 0.0), axis=1, keepdims=True)

        @pl.when(j == num_c_blocks - 1)
        def _():
            lse = m_sc[...] + jnp.log(l_sc[...])        # full per-row logsumexp
            # loss_row = (1-eps)*(lse - x_t) + (eps/C)*(C*lse - sum_c x)
            per_row = (coeff * (lse - xt_sc[...])
                       + smooth * (num_classes * lse - s_sc[...]))
            if mask_rows:   # last batch block is clipped: drop garbage rows
                rows = i * tile_b + jax.lax.broadcasted_iota(
                    jnp.int32, per_row.shape, 0)
                per_row = jnp.where(rows < batch, per_row, 0.0)
            o_ref[...] = jnp.full(o_ref.shape, jnp.sum(per_row), jnp.float32)

    return kernel


def cross_entropy_label_smooth(inputs, targets, num_classes, epsilon=0.1,
                               tile_b=None, tile_c=None):
    """inputs: (B, C) float logits (f32/bf16); targets: (B,) integer labels."""
    B, C = inputs.shape
    assert C == num_classes

    # --- class chunking ------------------------------------------------------
    if tile_c is None:
        tile_c = C if C <= _MAX_TILE_C else _MAX_TILE_C
    tile_c = int(tile_c)
    assert tile_c == C or tile_c % 128 == 0, "tile_c must be C or a multiple of 128"
    num_c_blocks = -(-C // tile_c)
    mask_cols = (num_c_blocks * tile_c != C)

    # --- batch tiling from an honest VMEM budget ------------------------------
    vmem_limit = _vmem_limit_bytes()
    b_ceil = max(8, ((B + 7) // 8) * 8)
    if tile_b is None:
        budget = (2 * vmem_limit) // 3
        lane_c = ((tile_c + 127) // 128) * 128          # VMEM lane padding
        # 2x double-buffered native-dtype input + ~6 f32/i32 full-chunk
        # temporaries (f32 cast, iota, masked copies, exp, one-hot select)
        # + 4 lane-padded (tile_b, 1) f32 scratch accumulators.
        row_bytes = lane_c * (2 * inputs.dtype.itemsize + 6 * 4) + 4 * 128 * 4
        tile_b = max(8, ((budget // row_bytes) // 8) * 8)
        tile_b = min(tile_b, _MAX_TILE_B, b_ceil)
        # Keep >=2 batch blocks for large batches so "parallel" feeds both
        # TensorCores on v7x.
        if tile_b >= b_ceil and b_ceil >= 2048:
            tile_b = max(8, ((b_ceil // 2 + 7) // 8) * 8)
    tile_b = max(8, (int(tile_b) // 8) * 8)
    tile_b = min(tile_b, b_ceil)

    num_b_blocks = -(-B // tile_b)
    mask_rows = (num_b_blocks * tile_b != B)

    # Logits are NOT padded/copied; only the tiny int32 targets get padded so
    # every targets block is fully valid.
    t = targets.reshape(B, 1).astype(jnp.int32)
    b_pad = num_b_blocks * tile_b
    if b_pad != B:
        t = jnp.pad(t, ((0, b_pad - B), (0, 0)))

    kernel = _make_kernel(num_classes, epsilon, B, tile_b, tile_c,
                          num_c_blocks, mask_rows, mask_cols)

    cost = pl.CostEstimate(
        flops=8 * B * C,
        transcendentals=B * C + 2 * B,
        bytes_accessed=(B * C * inputs.dtype.itemsize
                        + num_c_blocks * b_pad * 4
                        + num_b_blocks * 8 * 128 * 4),
    )

    partials = pl.pallas_call(
        kernel,
        out_shape=jax.ShapeDtypeStruct((num_b_blocks, 8, 128), jnp.float32),
        grid_spec=pltpu.PrefetchScalarGridSpec(
            num_scalar_prefetch=0,
            grid=(num_b_blocks, num_c_blocks),
            in_specs=[
                pl.BlockSpec((tile_b, tile_c), lambda i, j: (i, j)),
                pl.BlockSpec((tile_b, 1), lambda i, j: (i, 0)),
            ],
            out_specs=pl.BlockSpec((1, 8, 128), lambda i, j: (i, 0, 0)),
            scratch_shapes=[pltpu.VMEM((tile_b, 1), jnp.float32)] * 4,
        ),
        compiler_params=pltpu.CompilerParams(
            dimension_semantics=("parallel", "arbitrary"),
            vmem_limit_bytes=vmem_limit,
        ),
        cost_estimate=cost,
    )(inputs, t)

    # TODO(synk): for C << 128 the VPU/EUP lanes are mostly idle; packing
    # 128//C rows per vreg row (wrapper reshape + segmented reductions) would
    # recover up to ~8x, but typical classification/vocab C already fills lanes.
    return jnp.sum(partials[:, 0, 0]) / B


def _reference(inputs, targets, num_classes, epsilon=0.1):
    log_probs = jax.nn.log_softmax(inputs.astype(jnp.float32), axis=1)
    onehot = jax.nn.one_hot(targets, num_classes, dtype=jnp.float32)
    smoothed = (1.0 - epsilon) * onehot + epsilon / num_classes
    return (-smoothed * log_probs).mean(0).sum()


if __name__ == "__main__":
    epsilon = 0.1
    k1, k2, k3, k4, k5, k6 = jax.random.split(jax.random.PRNGKey(0), 6)

    # --- shape 1: B=10, C=16 (small classification head) ---------------------
    B1, C1 = 10, 16
    x1 = jax.random.normal(k1, (B1, C1), dtype=jnp.float32)
    t1 = jax.random.randint(k2, (B1,), 0, C1, dtype=jnp.int32)
    ref1 = _reference(x1, t1, C1, epsilon)

    # multi-batch-block path (tile_b=8 -> 2 blocks, clipped+masked last block)
    out = jax.block_until_ready(
        cross_entropy_label_smooth(x1, t1, C1, epsilon, tile_b=8))
    assert jnp.allclose(out, ref1, rtol=1e-5, atol=1e-4), (out, ref1)

    # default tile selection (single clipped block, no logits padding)
    out = jax.block_until_ready(cross_entropy_label_smooth(x1, t1, C1, epsilon))
    assert jnp.allclose(out, ref1, rtol=1e-5, atol=1e-4), (out, ref1)

    # bf16 logits straight from HBM; f32 cast happens in-kernel
    x1b = x1.astype(jnp.bfloat16)
    ref1b = _reference(x1b, t1, C1, epsilon)
    out = jax.block_until_ready(cross_entropy_label_smooth(x1b, t1, C1, epsilon))
    assert jnp.allclose(out, ref1b, rtol=1e-4, atol=1e-4), (out, ref1b)

    # --- shape 2: B=24, C=384 -> class axis split into 3 aligned chunks ------
    B2, C2 = 24, 384
    x2 = jax.random.normal(k3, (B2, C2), dtype=jnp.float32)
    t2 = jax.random.randint(k4, (B2,), 0, C2, dtype=jnp.int32)
    ref2 = _reference(x2, t2, C2, epsilon)
    out = jax.block_until_ready(
        cross_entropy_label_smooth(x2, t2, C2, epsilon, tile_c=128))
    assert jnp.allclose(out, ref2, rtol=1e-5, atol=1e-4), (out, ref2)

    # --- shape 3: B=12, C=200 -> clipped class chunk AND clipped batch block -
    B3, C3 = 12, 200
    x3 = jax.random.normal(k5, (B3, C3), dtype=jnp.float32)
    t3 = jax.random.randint(k6, (B3,), 0, C3, dtype=jnp.int32)
    ref3 = _reference(x3, t3, C3, epsilon)
    out = jax.block_until_ready(
        cross_entropy_label_smooth(x3, t3, C3, epsilon, tile_b=8, tile_c=128))
    assert jnp.allclose(out, ref3, rtol=1e-5, atol=1e-4), (out, ref3)

    print("KERNEL_OK")
</pallas_src>

<mosaic_0001>
module attributes {stable_mosaic.version = 11 : i64} {
  func.func @kernel(%arg0: i32, %arg1: i32, %arg2: memref<8x16xf32, #tpu.memory_space<vmem>>, %arg3: memref<8x1xi32, #tpu.memory_space<vmem>>, %arg4: memref<1x8x128xf32, #tpu.memory_space<vmem>>, %arg5: memref<8x1xf32, #tpu.memory_space<vmem>>, %arg6: memref<8x1xf32, #tpu.memory_space<vmem>>, %arg7: memref<8x1xf32, #tpu.memory_space<vmem>>, %arg8: memref<8x1xf32, #tpu.memory_space<vmem>>) attributes {dimension_semantics = [#tpu.dimension_semantics<parallel>, #tpu.dimension_semantics<arbitrary>], iteration_bounds = array<i64: 2, 1>, scalar_prefetch = 0 : i64, scratch_operands = 4 : i64, tpu.core_type = #tpu.core_type<tc>, window_params = [{transform_indices = @transform_0, window_bounds = array<i64: 8, 16>}, {transform_indices = @transform_1, window_bounds = array<i64: 8, 1>}, {transform_indices = @transform_2, window_bounds = array<i64: 1, 8, 128>}]} {
    %c0_i32 = arith.constant 0 : i32
    %0 = arith.cmpi eq, %arg1, %c0_i32 : i32
    %1 = arith.extui %0 : i1 to i32
    %c0_i32_0 = arith.constant 0 : i32
    %2 = arith.cmpi ne, %1, %c0_i32_0 : i32
    scf.if %2 {
      %cst_26 = arith.constant 0xFF800000 : f32
      %42 = vector.broadcast %cst_26 : f32 to vector<8x1xf32>
      %c0_27 = arith.constant 0 : index
      %c0_28 = arith.constant 0 : index
      %43 = vector.load %arg5[%c0_27, %c0_28] : memref<8x1xf32, #tpu.memory_space<vmem>>, vector<8x1xf32>
      tpu.vector_store %arg5[%c0_27, %c0_28], %42 {strides = array<i32>} : memref<8x1xf32, #tpu.memory_space<vmem>>, vector<8x1xf32>,
      %cst_29 = arith.constant 0.000000e+00 : f32
      %44 = vector.broadcast %cst_29 : f32 to vector<8x1xf32>
      %c0_30 = arith.constant 0 : index
      %c0_31 = arith.constant 0 : index
      %45 = vector.load %arg6[%c0_30, %c0_31] : memref<8x1xf32, #tpu.memory_space<vmem>>, vector<8x1xf32>
      tpu.vector_store %arg6[%c0_30, %c0_31], %44 {strides = array<i32>} : memref<8x1xf32, #tpu.memory_space<vmem>>, vector<8x1xf32>,
      %cst_32 = arith.constant 0.000000e+00 : f32
      %46 = vector.broadcast %cst_32 : f32 to vector<8x1xf32>
      %c0_33 = arith.constant 0 : index
      %c0_34 = arith.constant 0 : index
      %47 = vector.load %arg7[%c0_33, %c0_34] : memref<8x1xf32, #tpu.memory_space<vmem>>, vector<8x1xf32>
      tpu.vector_store %arg7[%c0_33, %c0_34], %46 {strides = array<i32>} : memref<8x1xf32, #tpu.memory_space<vmem>>, vector<8x1xf32>,
      %cst_35 = arith.constant 0.000000e+00 : f32
      %48 = vector.broadcast %cst_35 : f32 to vector<8x1xf32>
      %c0_36 = arith.constant 0 : index
      %c0_37 = arith.constant 0 : index
      %49 = vector.load %arg8[%c0_36, %c0_37] : memref<8x1xf32, #tpu.memory_space<vmem>>, vector<8x1xf32>
      tpu.vector_store %arg8[%c0_36, %c0_37], %48 {strides = array<i32>} : memref<8x1xf32, #tpu.memory_space<vmem>>, vector<8x1xf32>,
    } else {
    }
    %c0 = arith.constant 0 : index
    %c0_1 = arith.constant 0 : index
    %3 = vector.load %arg2[%c0, %c0_1] : memref<8x16xf32, #tpu.memory_space<vmem>>, vector<8x16xf32>
    %c0_2 = arith.constant 0 : index
    %c0_3 = arith.constant 0 : index
    %4 = vector.load %arg3[%c0_2, %c0_3] : memref<8x1xi32, #tpu.memory_space<vmem>>, vector<8x1xi32>
    %c16_i32 = arith.constant 16 : i32
    %5 = arith.muli %arg1, %c16_i32 : i32
    %6 = tpu.iota {dimensions = array<i32: 1>} : vector<8x16xi32>
    %7 = vector.broadcast %5 : i32 to vector<8x16xi32>
    %8 = arith.addi %7, %6 : vector<8x16xi32>
    %c0_4 = arith.constant 0 : index
    %c0_5 = arith.constant 0 : index
    %9 = vector.load %arg5[%c0_4, %c0_5] : memref<8x1xf32, #tpu.memory_space<vmem>>, vector<8x1xf32>
    %cst = arith.constant dense<0xFF800000> : vector<8xf32>
    %10 = vector.multi_reduction <maximumf>, %3, %cst [1] : vector<8x16xf32> to vector<8xf32>
    %11 = vector.shape_cast %10 : vector<8xf32> to vector<8x1xf32>
    %12 = arith.maximumf %9, %11 : vector<8x1xf32>
    %13 = arith.subf %9, %12 : vector<8x1xf32>
    %14 = math.exp %13 : vector<8x1xf32>
    %15 = vector.broadcast %12 : vector<8x1xf32> to vector<8x16xf32>
    %16 = arith.subf %3, %15 : vector<8x16xf32>
    %17 = math.exp %16 : vector<8x16xf32>
    %cst_6 = arith.constant dense<0.000000e+00> : vector<8xf32>
    %18 = vector.multi_reduction <add>, %17, %cst_6 [1] : vector<8x16xf32> to vector<8xf32>
    %19 = vector.shape_cast %18 : vector<8xf32> to vector<8x1xf32>
    %c0_7 = arith.constant 0 : index
    %c0_8 = arith.constant 0 : index
    %20 = vector.load %arg5[%c0_7, %c0_8] : memref<8x1xf32, #tpu.memory_space<vmem>>, vector<8x1xf32>
    tpu.vector_store %arg5[%c0_7, %c0_8], %12 {strides = array<i32>} : memref<8x1xf32, #tpu.memory_space<vmem>>, vector<8x1xf32>,
    %c0_9 = arith.constant 0 : index
    %c0_10 = arith.constant 0 : index
    %21 = vector.load %arg6[%c0_9, %c0_10] : memref<8x1xf32, #tpu.memory_space<vmem>>, vector<8x1xf32>
    %22 = arith.mulf %14, %21 : vector<8x1xf32>
    %23 = arith.addf %22, %19 : vector<8x1xf32>
    %c0_11 = arith.constant 0 : index
    %c0_12 = arith.constant 0 : index
    %24 = vector.load %arg6[%c0_11, %c0_12] : memref<8x1xf32, #tpu.memory_space<vmem>>, vector<8x1xf32>
    tpu.vector_store %arg6[%c0_11, %c0_12], %23 {strides = array<i32>} : memref<8x1xf32, #tpu.memory_space<vmem>>, vector<8x1xf32>,
    %c0_13 = arith.constant 0 : index
    %c0_14 = arith.constant 0 : index
    %25 = vector.load %arg7[%c0_13, %c0_14] : memref<8x1xf32, #tpu.memory_space<vmem>>, vector<8x1xf32>
    %cst_15 = arith.constant dense<0.000000e+00> : vector<8xf32>
    %26 = vector.multi_reduction <add>, %3, %cst_15 [1] : vector<8x16xf32> to vector<8xf32>
    %27 = vector.shape_cast %26 : vector<8xf32> to vector<8x1xf32>
    %28 = arith.addf %25, %27 : vector<8x1xf32>
    %c0_16 = arith.constant 0 : index
    %c0_17 = arith.constant 0 : index
    %29 = vector.load %arg7[%c0_16, %c0_17] : memref<8x1xf32, #tpu.memory_space<vmem>>, vector<8x1xf32>
    tpu.vector_store %arg7[%c0_16, %c0_17], %28 {strides = array<i32>} : memref<8x1xf32, #tpu.memory_space<vmem>>, vector<8x1xf32>,
    %c0_18 = arith.constant 0 : index
    %c0_19 = arith.constant 0 : index
    %30 = vector.load %arg8[%c0_18, %c0_19] : memref<8x1xf32, #tpu.memory_space<vmem>>, vector<8x1xf32>
    %31 = vector.broadcast %4 : vector<8x1xi32> to vector<8x16xi32>
    %32 = arith.cmpi eq, %8, %31 : vector<8x16xi32>
    %cst_20 = arith.constant 0.000000e+00 : f32
    %33 = vector.broadcast %cst_20 : f32 to vector<8x16xf32>
    %34 = arith.select %32, %3, %33 : vector<8x16xi1>, vector<8x16xf32>
    %cst_21 = arith.constant dense<0.000000e+00> : vector<8xf32>
    %35 = vector.multi_reduction <add>, %34, %cst_21 [1] : vector<8x16xf32> to vector<8xf32>
    %36 = vector.shape_cast %35 : vector<8xf32> to vector<8x1xf32>
    %37 = arith.addf %30, %36 : vector<8x1xf32>
    %c0_22 = arith.constant 0 : index
    %c0_23 = arith.constant 0 : index
    %38 = vector.load %arg8[%c0_22, %c0_23] : memref<8x1xf32, #tpu.memory_space<vmem>>, vector<8x1xf32>
    tpu.vector_store %arg8[%c0_22, %c0_23], %37 {strides = array<i32>} : memref<8x1xf32, #tpu.memory_space<vmem>>, vector<8x1xf32>,
    %c0_i32_24 = arith.constant 0 : i32
    %39 = arith.cmpi eq, %arg1, %c0_i32_24 : i32
    %40 = arith.extui %39 : i1 to i32
    %c0_i32_25 = arith.constant 0 : i32
    %41 = arith.cmpi ne, %40, %c0_i32_25 : i32
    scf.if %41 {
      %c0_26 = arith.constant 0 : index
      %c0_27 = arith.constant 0 : index
      %42 = vector.load %arg5[%c0_26, %c0_27] : memref<8x1xf32, #tpu.memory_space<vmem>>, vector<8x1xf32>
      %c0_28 = arith.constant 0 : index
      %c0_29 = arith.constant 0 : index
      %43 = vector.load %arg6[%c0_28, %c0_29] : memref<8x1xf32, #tpu.memory_space<vmem>>, vector<8x1xf32>
      %44 = math.log %43 : vector<8x1xf32>
      %45 = arith.addf %42, %44 : vector<8x1xf32>
      %c0_30 = arith.constant 0 : index
      %c0_31 = arith.constant 0 : index
      %46 = vector.load %arg8[%c0_30, %c0_31] : memref<8x1xf32, #tpu.memory_space<vmem>>, vector<8x1xf32>
      %47 = arith.subf %45, %46 : vector<8x1xf32>
      %cst_32 = arith.constant 0.899999976 : f32
      %48 = vector.broadcast %cst_32 : f32 to vector<8x1xf32>
      %49 = arith.mulf %48, %47 : vector<8x1xf32>
      %cst_33 = arith.constant 1.600000e+01 : f32
      %50 = vector.broadcast %cst_33 : f32 to vector<8x1xf32>
      %51 = arith.mulf %50, %45 : vector<8x1xf32>
      %c0_34 = arith.constant 0 : index
      %c0_35 = arith.constant 0 : index
      %52 = vector.load %arg7[%c0_34, %c0_35] : memref<8x1xf32, #tpu.memory_space<vmem>>, vector<8x1xf32>
      %53 = arith.subf %51, %52 : vector<8x1xf32>
      %cst_36 = arith.constant 6.250000e-03 : f32
      %54 = vector.broadcast %cst_36 : f32 to vector<8x1xf32>
      %55 = arith.mulf %54, %53 : vector<8x1xf32>
      %56 = arith.addf %49, %55 : vector<8x1xf32>
      %c8_i32 = arith.constant 8 : i32
      %57 = arith.muli %arg0, %c8_i32 : i32
      %58 = tpu.iota {dimensions = array<i32: 0>} : vector<8x1xi32>
      %59 = vector.broadcast %57 : i32 to vector<8x1xi32>
      %60 = arith.addi %59, %58 : vector<8x1xi32>
      %c10_i32 = arith.constant 10 : i32
      %61 = vector.broadcast %c10_i32 : i32 to vector<8x1xi32>
      %62 = arith.cmpi slt, %60, %61 : vector<8x1xi32>
      %cst_37 = arith.constant 0.000000e+00 : f32
      %63 = vector.broadcast %cst_37 : f32 to vector<8x1xf32>
      %64 = arith.select %62, %56, %63 : vector<8x1xi1>, vector<8x1xf32>
      %65 = vector.shape_cast %64 : vector<8x1xf32> to vector<1x8x1xf32>
      %cst_38 = arith.constant dense<0.000000e+00> : vector<1xf32>
      %66 = vector.multi_reduction <add>, %65, %cst_38 [1, 2] : vector<1x8x1xf32> to vector<1xf32>
      %67 = vector.shape_cast %66 : vector<1xf32> to vector<1x1x1xf32>
      %68 = vector.extract %67[0, 0, 0] : f32 from vector<1x1x1xf32>
      %69 = vector.broadcast %68 : f32 to vector<1x8x128xf32>
      %c0_39 = arith.constant 0 : index
      %c0_40 = arith.constant 0 : index
      %c0_41 = arith.constant 0 : index
      %70 = vector.load %arg4[%c0_39, %c0_40, %c0_41] : memref<1x8x128xf32, #tpu.memory_space<vmem>>, vector<1x8x128xf32>
      tpu.vector_store %arg4[%c0_39, %c0_40, %c0_41], %69 {strides = array<i32>} : memref<1x8x128xf32, #tpu.memory_space<vmem>>, vector<1x8x128xf32>,
    } else {
    }
    return
  }
  func.func @transform_0(%arg0: i32, %arg1: i32) -> (i32, i32) {
    %c0_i32 = arith.constant 0 : i32
    return %arg0, %arg1 : i32, i32
  }
  func.func @transform_1(%arg0: i32, %arg1: i32) -> (i32, i32) {
    %c0_i32 = arith.constant 0 : i32
    %c0_i32_0 = arith.constant 0 : i32
    return %arg0, %c0_i32 : i32, i32
  }
  func.func @transform_2(%arg0: i32, %arg1: i32) -> (i32, i32, i32) {
    %c0_i32 = arith.constant 0 : i32
    %c0_i32_0 = arith.constant 0 : i32
    %c0_i32_1 = arith.constant 0 : i32
    return %arg0, %c0_i32, %c0_i32_0 : i32, i32, i32
  }
}

</mosaic_0001>

<llo_original>
// kernel: tpu_custom_call.1
$region0: #{tpu_custom_call.1}
  #allocation0 [shape = 'u32[]', space=smem, size = 0x4, offset = 0x4, fixed_abs, tag = 'smem constant byte address 0x4 - core index']
  #allocation1 [shape = 'u32[72,128]{1,0:T(1,128)}', space=vmem, size = 0x9000, scoped, tag = 'internal scratch']
  #allocation2 [shape = 'f32[8,1]{1,0:T(8,128)}', space=vmem, size = 0x1000, scoped, tag = 'scratch operand']
  #allocation3 [shape = 'f32[8,1]{1,0:T(8,128)}', space=vmem, size = 0x1000, scoped, tag = 'scratch operand']
  #allocation4 [shape = 'f32[8,1]{1,0:T(8,128)}', space=vmem, size = 0x1000, scoped, tag = 'scratch operand']
  #allocation5 [shape = 'f32[8,1]{1,0:T(8,128)}', space=vmem, size = 0x1000, scoped, tag = 'scratch operand']
  %s0 = inlined_call_operand.vmem [shape: f32[10,16], index: 0, kind: input, shape index: {}]
  %s1 = inlined_call_operand.vmem [shape: s32[16,1], index: 1, kind: input, shape index: {}]
  %s2 = inlined_call_operand.hbm [shape: f32[2,8,128], index: 2, kind: output, shape index: {}]
  %s3 = sld [smem:[#allocation0]]
  $region49: #{tpu_custom_call.1} parent=0
    _
  %s5 = ssub.s32 1, %s3
  %s6 = scalar_select 0, %s5, %s3
  $region1: #{tpu_custom_call.1} parent=0
    #allocation6 [shape = 'u8[8192]{0}', space=vmem, size = 0x2000, scoped, tag = 'output window, operand 0']
    #allocation7 [shape = 's32[2]{0}', space=sflag, size = 0x8, scoped, tag = 'scoped memory for tpu_custom_call.1']
    %7 = vsyncpa [#allocation7], 0
    %s8 = scalar_lea.sflag [#allocation7], 1
    %9 = vsyncpa %s8, 0
    loop: start=0, step=1, limit=4
    $region2: #{tpu_custom_call.1} parent=1 // loop_pre_header
      _
    $region3: #{tpu_custom_call.1} parent=1 // loop_header
      %s11 = sphi 0, %s15
      %p12 = scmp.ge.s32.totalorder %s11, 4
      %s18 = sphi 0, %s30
      %s19 = sphi 0, %s26
      %s20 = sphi 0, %s18
      %s21 = sphi 0, %s19
      %s22 = sphi 0, %s20
      %s23 = sphi 0, %s21
      %s35 = sphi 0, %s37
      %s38 = sphi 0, %s35
      %s39 = sphi 0, %s38
      %s55 = sphi 0, %s39
      %s61 = sphi 0, %s63
      %s64 = sphi 0, %s61
      %s65 = sphi 0, %s64
      %s81 = sphi 0, %s65
      %s87 = sphi 0, %s89
      %s90 = sphi 0, %s87
      %s91 = sphi 0, %s90
      %s107 = sphi 0, %s91
    $region4: #{tpu_custom_call.1} parent=1 // loop_header_branch
      %14 = sbr.rel (%p12) target = $region8
    $region5: #{tpu_custom_call.1} parent=1 // loop_body
      %s16 = ssub.s32 %s11, 1
      %s17 = ssub.s32 %s11, 2
      %s24 = sadd.s32 1, %s19
      %p25 = scmp.ge.s32.totalorder %s24, 1
      %s26 = scalar_select %p25, 0, %s24
      %s27 = sadd.s32 1, %s18
      %s28 = scalar_select %p25, %s27, %s18
      %p29 = scmp.ge.s32.totalorder %s28, 2
      %s30 = scalar_select %p29, 0, %s28
      %s31 = ssub.s32 %s18, %s30
      %s32 = ssub.s32 %s19, %s26
      %s33 = sor.u32 %s31, %s32
      %p34 = scmp.eq.s32.totalorder %s33, 0
      %s36 = sadd.s32 %s35, 1
      %s37 = scalar_select %p34, %s35, %s36
      %p40 = pneg %p34
      %p41 = scmp.eq.s32.totalorder %s11, 1
      %p42 = por %p40, %p41
      %p43 = scmp.ne.s32.totalorder %s35, %s38
      %p44 = scmp.eq.s32.totalorder %s11, 0
      %p45 = por %p43, %p44
      %p46 = scmp.ne.s32.totalorder %s35, %s38
      %p47 = scmp.eq.s32.totalorder %s16, 1
      %p48 = por %p46, %p47
      %p49 = scmp.ne.s32.totalorder %s38, %s39
      %p50 = scmp.eq.s32.totalorder %s16, 0
      %p51 = por %p49, %p50
      %p52 = scmp.ne.s32.totalorder %s38, %s39
      %p53 = scmp.eq.s32.totalorder %s17, 1
      %p54 = por %p52, %p53
      %p56 = scmp.ne.s32.totalorder %s39, %s55
      %p57 = scmp.eq.s32.totalorder %s17, 0
      %p58 = por %p56, %p57
      %s59 = ssub.s32 %s18, %s30
      %p60 = scmp.eq.s32.totalorder %s59, 0
      %s62 = sadd.s32 %s61, 1
      %s63 = scalar_select %p60, %s61, %s62
      %p66 = pneg %p60
      %p67 = scmp.eq.s32.totalorder %s11, 1
      %p68 = por %p66, %p67
      %p69 = scmp.ne.s32.totalorder %s61, %s64
      %p70 = scmp.eq.s32.totalorder %s11, 0
      %p71 = por %p69, %p70
      %p72 = scmp.ne.s32.totalorder %s61, %s64
      %p73 = scmp.eq.s32.totalorder %s16, 1
      %p74 = por %p72, %p73
      %p75 = scmp.ne.s32.totalorder %s64, %s65
      %p76 = scmp.eq.s32.totalorder %s16, 0
      %p77 = por %p75, %p76
      %p78 = scmp.ne.s32.totalorder %s64, %s65
      %p79 = scmp.eq.s32.totalorder %s17, 1
      %p80 = por %p78, %p79
      %p82 = scmp.ne.s32.totalorder %s65, %s81
      %p83 = scmp.eq.s32.totalorder %s17, 0
      %p84 = por %p82, %p83
      %s85 = ssub.s32 %s18, %s30
      %p86 = scmp.eq.s32.totalorder %s85, 0
      %s88 = sadd.s32 %s87, 1
      %s89 = scalar_select %p86, %s87, %s88
      %p92 = pneg %p86
      %p93 = scmp.eq.s32.totalorder %s11, 1
      %p94 = por %p92, %p93
      %p95 = scmp.ne.s32.totalorder %s87, %s90
      %p96 = scmp.eq.s32.totalorder %s11, 0
      %p97 = por %p95, %p96
      %p98 = scmp.ne.s32.totalorder %s87, %s90
      %p99 = scmp.eq.s32.totalorder %s16, 1
      %p100 = por %p98, %p99
      %p101 = scmp.ne.s32.totalorder %s90, %s91
      %p102 = scmp.eq.s32.totalorder %s16, 0
      %p103 = por %p101, %p102
      %p104 = scmp.ne.s32.totalorder %s90, %s91
      %p105 = scmp.eq.s32.totalorder %s17, 1
      %p106 = por %p104, %p105
      %p108 = scmp.ne.s32.totalorder %s91, %s107
      %p109 = scmp.eq.s32.totalorder %s17, 0
      %p110 = por %p108, %p109
      %p111 = scmp.le.s32.totalorder 1, %s11
      %p112 = scmp.lt.s32.totalorder %s11, 3
      %p113 = pnand %p111, %p112
      %p114 = pneg %p113
      // Predicated region
      $region9: #{tpu_custom_call.1} parent=5 // pred_check
        _
      $region10: #{tpu_custom_call.1} parent=5 // pred_check_branch
        %116 = sbr.rel (%p113) target = $region12
      $region11: #{tpu_custom_call.1} parent=5 // pred_region
        %s117 = ssub.s32 %s11, 1
      $region12: #{tpu_custom_call.1} parent=5 // pred_fallthru
        _
      %p118 = scmp.lt.s32.totalorder %s11, 2
      // Predicated region
      $region13: #{tpu_custom_call.1} parent=5 // pred_check
        %p119 = pneg %p118
      $region14: #{tpu_custom_call.1} parent=5 // pred_check_branch
        %121 = sbr.rel (%p119) target = $region16
      $region15: #{tpu_custom_call.1} parent=5 // pred_region
        // Predicated region
        $region17: #{tpu_custom_call.1} parent=15 // pred_check
          %p122 = pneg %p45
        $region18: #{tpu_custom_call.1} parent=15 // pred_check_branch
          %124 = sbr.rel (%p122) target = $region20
        $region19: #{tpu_custom_call.1} parent=15 // pred_region
          %p125 = scmp.lt.s32.totalorder %s18, 1
          %s126 = scalar_select %p125, %s18, 1
          %p127 = scmp.lt.s32.totalorder %s19, 0
          %s128 = scalar_select %p127, %s19, 0
          %s129 = sadd.s32 %s128, %s126
          %s130 = smul.addr %s129, 8
          %s131 = scalar_lea.vmem %s0, %s130
        $region20: #{tpu_custom_call.1} parent=15 // pred_fallthru
          _
        // Predicated region
        $region21: #{tpu_custom_call.1} parent=15 // pred_check
          %p132 = pneg %p71
        $region22: #{tpu_custom_call.1} parent=15 // pred_check_branch
          %134 = sbr.rel (%p132) target = $region24
        $region23: #{tpu_custom_call.1} parent=15 // pred_region
          %p135 = scmp.lt.s32.totalorder %s18, 1
          %s136 = scalar_select %p135, %s18, 1
          %s137 = smul.addr %s136, 8
          %s138 = scalar_lea.vmem %s1, %s137
        $region24: #{tpu_custom_call.1} parent=15 // pred_fallthru
          _
      $region16: #{tpu_custom_call.1} parent=5 // pred_fallthru
        _
      %p139 = scmp.le.s32.totalorder 1, %s11
      %p140 = scmp.lt.s32.totalorder %s11, 3
      %p141 = pnand %p139, %p140
      %p142 = pneg %p141
      // Predicated region
      $region25: #{tpu_custom_call.1} parent=5 // pred_check
        _
      $region26: #{tpu_custom_call.1} parent=5 // pred_check_branch
        %144 = sbr.rel (%p141) target = $region28
      $region27: #{tpu_custom_call.1} parent=5 // pred_region
        %s145 = ssub.s32 %s11, 1
        %p146 = scmp.lt.s32.totalorder %s20, 1
        %s147 = scalar_select %p146, %s20, 1
        %p148 = scmp.lt.s32.totalorder %s21, 0
        %s149 = scalar_select %p148, %s21, 0
        %s150 = sadd.s32 %s149, %s147
        %s151 = smul.addr %s150, 8
        %s152 = scalar_lea.vmem %s0, %s151
        %p153 = pneg %p51
        %p154 = pneg %p48
        %p155 = scmp.lt.s32.totalorder %s20, 1
        %s156 = scalar_select %p155, %s20, 1
        %s157 = smul.addr %s156, 8
        %s158 = scalar_lea.vmem %s1, %s157
        %p159 = pneg %p77
        %p160 = pneg %p74
        %p161 = pneg %p103
        %p162 = pneg %p100
        %s163 = sand.u32 %s90, 1
        %s164 = scalar_lea.sflag [#allocation7], %s163
        %s165 = sand.u32 %s90, 1
        %s166 = smul.addr %s165, 8
        %s167 = scalar_lea.vmem [#allocation6], %s166
        %p168 = scmp.lt.s32.totalorder %s20, 1
        %s169 = scalar_select %p168, %s20, 1
        %p170 = scmp.lt.s32.totalorder %s21, 0
        %s171 = scalar_select %p170, %s21, 0
        %s172 = sadd.s32 %s171, %s169
        %s173 = smul.addr %s172, 8
        %s174 = scalar_lea.vmem %s0, %s173
        %p175 = scmp.lt.s32.totalorder %s20, 1
        %s176 = scalar_select %p175, %s20, 1
        %s177 = smul.addr %s176, 8
        %s178 = scalar_lea.vmem %s1, %s177
        %p179 = scmp.eq.s32.totalorder %s21, 0
        // Predicated region
        $region29: #{tpu_custom_call.1} parent=27 // pred_check
          %p180 = pneg %p179
        $region30: #{tpu_custom_call.1} parent=27 // pred_check_branch
          %182 = sbr.rel (%p180) target = $region32
        $region31: #{tpu_custom_call.1} parent=27 // pred_region
          %vm183 = vcmask 7168
          %184 = vst.msk [vmem:[#allocation2] sm:$0xff] %vm183, -inf
          %185 = vst.msk [vmem:[#allocation3] sm:$0xff] %vm183, 0.0
          %186 = vst.msk [vmem:[#allocation4] sm:$0xff] %vm183, 0.0
          %187 = vst.msk [vmem:[#allocation5] sm:$0xff] %vm183, 0.0
        $region32: #{tpu_custom_call.1} parent=27 // pred_fallthru
          _
        %v188 = vld [vmem:[%s174] sm:$0xff]
        %v189 = vld [vmem:[%s178] sm:$0xff]
        %s190 = smul.u32 %s21, 16
        %v191 = vlaneseq
        %v192 = vand.u32 %v191, 127
        %v193 = vstv %s190
        %v194 = vadd.s32 %v193, %v192
        %v195 = vld [vmem:[#allocation2] sm:$0xff]
        %vm196 = vcmask 130048
        %v197 = vsel %vm196, %v188, -inf
        %198 = vmax.xlane.f32.xlu0 %v197
        %v199 = vpop.xlane.xlu0 %198
        %v200 = vmax.f32 %v195, %v199
        %v201 = vsub.f32 %v195, %v200
        %v202 = vmul.f32 %v201, 1.442695
        %v203 = vpow.pop %v202
        %205 = vset.pattern.permute.xlu0 0
        %206 = vperm.xlu0 %205, %v200
        %v207 = vpop.permute.xlu0 %206
        %v209 = vsub.f32 %v188, %v207
        %v210 = vmul.f32 %v209, 1.442695
        %v211 = vpow.pop %v210
        %v212 = vsel %vm196, %v211, 0.0
        %213 = vadd.xlane.f32.xlu0 %v212
        %v214 = vpop.xlane.xlu0 %213
        %vm215 = vcmask 7168
        %216 = vst.msk [vmem:[#allocation2] sm:$0xff] %vm215, %v200
        %v217 = vld [vmem:[#allocation3] sm:$0xff]
        %v218 = vmul.f32 %v203, %v217
        %v219 = vadd.f32 %v218, %v214
        %220 = vst.msk [vmem:[#allocation3] sm:$0xff] %vm215, %v219
        %v221 = vld [vmem:[#allocation4] sm:$0xff]
        %v222 = vsel %vm196, %v188, 0.0
        %223 = vadd.xlane.f32.xlu0 %v222
        %v224 = vpop.xlane.xlu0 %223
        %v225 = vadd.f32 %v221, %v224
        %226 = vst.msk [vmem:[#allocation4] sm:$0xff] %vm215, %v225
        %v227 = vld [vmem:[#allocation5] sm:$0xff]
        %228 = vset.pattern.permute.xlu0 0
        %229 = vperm.xlu0 %228, %v189
        %v230 = vpop.permute.xlu0 %229
        %vm231 = vcmp.eq.s32.totalorder %v194, %v230
        %v232 = vsel %vm231, %v188, 0.0
        %v233 = vsel %vm196, %v232, 0.0
        %234 = vadd.xlane.f32.xlu0 %v233
        %v235 = vpop.xlane.xlu0 %234
        %v236 = vadd.f32 %v227, %v235
        %237 = vst.msk [vmem:[#allocation5] sm:$0xff] %vm215, %v236
        // Predicated region
        $region33: #{tpu_custom_call.1} parent=27 // pred_check
          %p238 = pneg %p179
        $region34: #{tpu_custom_call.1} parent=27 // pred_check_branch
          %240 = sbr.rel (%p238) target = $region36
        $region35: #{tpu_custom_call.1} parent=27 // pred_region
          %v241 = vld [vmem:[#allocation2] sm:$0xff]
          %v242 = vld [vmem:[#allocation3] sm:$0xff]
          %v243 = vlog2.pop %v242
          %v244 = vmul.f32 %v243, 0.6931472
          %v245 = vadd.f32 %v241, %v244
          %v246 = vld [vmem:[#allocation5] sm:$0xff]
          %v247 = vsub.f32 %v245, %v246
          %v248 = vmul.f32 %v247, 0.9
          %v249 = vmul.f32 %v245, 16.0
          %v250 = vld [vmem:[#allocation4] sm:$0xff]
          %v251 = vsub.f32 %v249, %v250
          %v252 = vmul.f32 %v251, 0.00625
          %v253 = vadd.f32 %v248, %v252
          %s254 = smul.u32 %s20, 8
          %v255 = vlaneseq
          %v256 = vshrl.u32 %v255, 7
          %v257 = vstv %s254
          %v258 = vadd.s32 %v257, %v256
          %vm259 = vcmp.lt.s32.totalorder %v258, 10
          %v260 = vsel %vm259, %v253, 0.0
          %v261 = vsel %vm215, %v260, 0.0
          %262 = vadd.xlane.f32.xlu0 %v261
          %v263 = vpop.xlane.xlu0 %262
          %v264 = vrot.slane %v263, 4
          %v265 = vadd.f32 %v263, %v264
          %v266 = vrot.slane %v265, 2
          %v267 = vadd.f32 %v265, %v266
          %v268 = vrot.slane %v267, 1
          %v269 = vadd.f32 %v267, %v268
          %s270 = vtos %v269
          %v271 = vstv %s270
          %272 = vst [vmem:[%s167] sm:$0xff] %v271
        $region36: #{tpu_custom_call.1} parent=27 // pred_fallthru
          _
        %s273 = sand.u32 %s90, 1
        %s274 = scalar_lea.sflag [#allocation7], %s273
        %s275 = sand.u32 %s90, 1
        %s276 = smul.addr %s275, 8
        %s277 = scalar_lea.vmem [#allocation6], %s276
        // Predicated region
        $region37: #{tpu_custom_call.1} parent=27 // pred_check
          %p278 = pneg %p100
        $region38: #{tpu_custom_call.1} parent=27 // pred_check_branch
          %280 = sbr.rel (%p278) target = $region40
        $region39: #{tpu_custom_call.1} parent=27 // pred_region
          %282 = vsyncadd %s274, 0
          %s283 = smul.addr %s20, 8
          %s284 = scalar_lea.hbm %s2, %s283
          %s286 = sshll.u32 %s277, 4
          %s287 = int_to_ptr.vmem [resolvable:$true] %s286
          %s288 = sshll.u32 %s284, 4
          %s289 = int_to_ptr.hbm [resolvable:$true] %s288
          %291 = dma.vmem_to_hbm [thread:$0]  %s287, 128, %s289, %s274
        $region40: #{tpu_custom_call.1} parent=27 // pred_fallthru
          _
      $region28: #{tpu_custom_call.1} parent=5 // pred_fallthru
        _
      %p292 = scmp.le.s32.totalorder 2, %s11
      // Predicated region
      $region41: #{tpu_custom_call.1} parent=5 // pred_check
        %p293 = pneg %p292
      $region42: #{tpu_custom_call.1} parent=5 // pred_check_branch
        %295 = sbr.rel (%p293) target = $region44
      $region43: #{tpu_custom_call.1} parent=5 // pred_region
        %s296 = ssub.s32 %s11, 2
        // Predicated region
        $region45: #{tpu_custom_call.1} parent=43 // pred_check
          %p297 = pneg %p106
        $region46: #{tpu_custom_call.1} parent=43 // pred_check_branch
          %299 = sbr.rel (%p297) target = $region48
        $region47: #{tpu_custom_call.1} parent=43 // pred_region
          %s300 = sand.u32 %s91, 1
          %s301 = scalar_lea.sflag [#allocation7], %s300
          %s302 = sand.u32 %s91, 1
          %s303 = smul.addr %s302, 8
          %s304 = scalar_lea.vmem [#allocation6], %s303
          %306 = dma.done %s301, 128
        $region48: #{tpu_custom_call.1} parent=43 // pred_fallthru
          _
      $region44: #{tpu_custom_call.1} parent=5 // pred_fallthru
        _
    $region6: #{tpu_custom_call.1} parent=1 // loop_footer
      %s15 = sadd.s32 1, %s11
    $region7: #{tpu_custom_call.1} parent=1 // loop_footer_branch
      %10 = sbr.rel target = $region3
    $region8: #{tpu_custom_call.1} parent=1 // loop_exit
      _
    %307 = vsyncpa [#allocation7], 1
    %s308 = scalar_lea.sflag [#allocation7], 1
    %309 = vsyncpa %s308, 1

</llo_original>
